<compile_context>
chip_gen: v5e
topology: v5e:2x2
jax: 0.10.0
libtpu: 0.0.40
codegen_flags: <defaults>
</compile_context>

<pallas_src>
import jax
import jax.numpy as jnp
from jax.experimental import pallas as pl
from jax.experimental.pallas import tpu as pltpu


def _round_up(n, m):
    return ((n + m - 1) // m) * m


def _default_elementwise_dtype():
    # bf16 VPU/EUP paths exist on v6e / v7x; older chips (v5e and earlier) keep f32.
    try:
        kind = jax.devices()[0].device_kind.lower()
    except Exception:
        return jnp.float32
    if any(tag in kind for tag in ("v6", "v7", "7x")):
        return jnp.bfloat16
    return jnp.float32


def init_params(key, depth=3, units=64, preds=1):
    """Canonical nn.Linear-style parameters: per layer (W (out, in) f32, b (out,) f32),
    initialized like PyTorch (uniform +-1/sqrt(fan_in))."""
    sizes = [units] * depth + [preds]
    ks = jax.random.split(key, 2 * (len(sizes) - 1))
    params = []
    for i in range(len(sizes) - 1):
        fan_in, fan_out = sizes[i], sizes[i + 1]
        bound = 1.0 / (fan_in ** 0.5)
        w = jax.random.uniform(ks[2 * i], (fan_out, fan_in), jnp.float32, -bound, bound)
        b = jax.random.uniform(ks[2 * i + 1], (fan_out,), jnp.float32, -bound, bound)
        params.append((w, b))
    return params


def prepare_params(params):
    """Kernel layout: weights pre-scaled by 0.5 (folds the tanh-form sigmoid constant, exact
    in FP) and cast to bf16 for the MXU; biases pre-scaled by 0.5, kept f32, shaped (out, 1)
    so they broadcast over the lane (batch) axis of the transposed activations."""
    flat = []
    for (w, b) in params:
        flat.append((0.5 * w).astype(jnp.bfloat16))                    # (out, in) bf16
        flat.append((0.5 * b).reshape(-1, 1).astype(jnp.float32))      # (out, 1)  f32
    return tuple(flat)


def parnet_forward(x, kernel_params, *, tile_b=8192, elementwise_dtype=None):
    """x: (B, units) float32. Returns (B,) float32 = sigmoid(MLP(x)).squeeze(-1)."""
    w0, b0, w1, b1, w2, b2 = kernel_params
    B, F = x.shape
    assert w0.shape == (F, F) and w2.shape[0] == 1

    if elementwise_dtype is None:
        elementwise_dtype = _default_elementwise_dtype()
    ew = elementwise_dtype

    # Tile selection: big tiles to hit the HBM roofline; split into >=2 tiles when possible
    # (v7x megacore); an exact single tile for tiny batches (avoids over-reading).
    tile_b = max(128, int(tile_b))
    if B <= tile_b:
        if B >= 512:
            tile_b = _round_up(pl.cdiv(B, 2), 128)
        else:
            tile_b = B  # block == full batch dim -> always a legal BlockSpec
    num_tiles = pl.cdiv(B, tile_b)

    def kernel(x_ref, w0_ref, b0_ref, w1_ref, b1_ref, w2_ref, b2_ref, o_ref):
        # One XLU transpose per tile puts the batch on the lane axis: (TILE_B, F) -> (F, TILE_B).
        # All elementwise work below runs fully lane-packed.
        xt = jnp.transpose(x_ref[...]).astype(jnp.bfloat16)

        # Layer 0: weights/biases carry the folded 0.5, so t = 0.5*(x @ W0^T + b0) and
        # silu(x @ W0^T + b0) == t * (1 + tanh(t)).
        t = (jnp.dot(w0_ref[...], xt, preferred_element_type=jnp.float32)
             + b0_ref[...]).astype(ew)
        a = t * (1 + jnp.tanh(t))

        # Layer 1.
        t = (jnp.dot(w1_ref[...], a.astype(jnp.bfloat16), preferred_element_type=jnp.float32)
             + b1_ref[...]).astype(ew)
        a = t * (1 + jnp.tanh(t))

        # Layer 2 (64 -> 1), lane-dense (1, TILE_B) result; sigmoid(z) == 0.5*(1 + tanh(0.5*z)).
        t = (jnp.dot(w2_ref[...], a.astype(jnp.bfloat16), preferred_element_type=jnp.float32)
             + b2_ref[...]).astype(ew)
        y = 0.5 * (jnp.tanh(t) + 1)

        o_ref[...] = y.reshape(o_ref.shape).astype(o_ref.dtype)

    resident = lambda i: (0, 0)  # same block every grid step -> weights stay VMEM-resident

    flops = 2 * B * F * (2 * F + 1)
    transcendentals = B * (2 * F + 1)
    bytes_accessed = int(x.size * x.dtype.itemsize) + B * 4 + sum(
        int(p.size * p.dtype.itemsize) for p in kernel_params)

    out = pl.pallas_call(
        kernel,
        grid=(num_tiles,),
        in_specs=[
            pl.BlockSpec((tile_b, F), lambda i: (i, 0)),  # x: pipelined batch tiles (f32 in HBM)
            pl.BlockSpec((F, F), resident),               # 0.5*W0 (out, in) bf16
            pl.BlockSpec((F, 1), resident),               # 0.5*b0 (out, 1)  f32
            pl.BlockSpec((F, F), resident),               # 0.5*W1 bf16
            pl.BlockSpec((F, 1), resident),               # 0.5*b1 f32
            pl.BlockSpec((1, F), resident),               # 0.5*w2 row bf16
            pl.BlockSpec((1, 1), resident),               # 0.5*b2 f32
        ],
        out_specs=pl.BlockSpec((1, 1, tile_b), lambda i: (i, 0, 0)),
        out_shape=jax.ShapeDtypeStruct((num_tiles, 1, tile_b), jnp.float32),
        compiler_params=pltpu.CompilerParams(
            dimension_semantics=("parallel",),  # v7x: shard batch tiles across both TCs
        ),
        cost_estimate=pl.CostEstimate(
            flops=flops, transcendentals=transcendentals, bytes_accessed=bytes_accessed),
    )(x, w0, b0, w1, b1, w2, b2)

    # squeeze(dim=-1) semantics + drop rows from the ragged last tile (never consume them).
    return out.reshape(num_tiles * tile_b)[:B]


def parnet_reference(x, params):
    """Pure-JAX f32 reference of ParNet.forward. x and W are bf16-rounded (like the kernel);
    the kernel's intermediate-activation bf16 rounding is covered by the test tolerance."""
    h = x.astype(jnp.bfloat16).astype(jnp.float32)
    n = len(params)
    for i, (w, b) in enumerate(params):
        wq = w.astype(jnp.bfloat16).astype(jnp.float32)
        h = h @ wq.T + b
        h = jax.nn.silu(h) if i < n - 1 else jax.nn.sigmoid(h)
    return h[..., 0]


if __name__ == "__main__":
    key = jax.random.PRNGKey(0)
    k_p, k_x1, k_x2 = jax.random.split(key, 3)

    UNITS, PREDS = 64, 1
    params = init_params(k_p, depth=3, units=UNITS, preds=PREDS)
    kparams = prepare_params(params)

    # Small batch (exercises the exact single-tile path and the output squeeze).
    B1 = 10
    x1 = jax.random.normal(k_x1, (B1, UNITS), jnp.float32)
    out1 = jax.block_until_ready(parnet_forward(x1, kparams))
    ref1 = parnet_reference(x1, params)
    assert out1.shape == (B1,)
    err1 = float(jnp.max(jnp.abs(out1 - ref1)))
    assert err1 < 2.5e-2, err1

    # Multi-tile batch with a ragged last block (exercises the batch grid, pipelining,
    # resident weights, and the un-padded ragged-read path).
    B2 = 1000
    x2 = jax.random.normal(k_x2, (B2, UNITS), jnp.float32)
    out2 = jax.block_until_ready(parnet_forward(x2, kparams, tile_b=256))
    ref2 = parnet_reference(x2, params)
    assert out2.shape == (B2,)
    err2 = float(jnp.max(jnp.abs(out2 - ref2)))
    assert err2 < 2.5e-2, err2

    print("KERNEL_OK")
</pallas_src>

<mosaic_0001>
module attributes {stable_mosaic.version = 11 : i64} {
  func.func @kernel(%arg0: i32, %arg1: memref<10x64xf32, #tpu.memory_space<vmem>>, %arg2: memref<64x64xbf16, #tpu.memory_space<vmem>>, %arg3: memref<64x1xf32, #tpu.memory_space<vmem>>, %arg4: memref<64x64xbf16, #tpu.memory_space<vmem>>, %arg5: memref<64x1xf32, #tpu.memory_space<vmem>>, %arg6: memref<1x64xbf16, #tpu.memory_space<vmem>>, %arg7: memref<1x1xf32, #tpu.memory_space<vmem>>, %arg8: memref<1x1x10xf32, #tpu.memory_space<vmem>>) attributes {dimension_semantics = [#tpu.dimension_semantics<parallel>], iteration_bounds = array<i64: 1>, scalar_prefetch = 0 : i64, scratch_operands = 0 : i64, tpu.core_type = #tpu.core_type<tc>, window_params = [{transform_indices = @transform_0, window_bounds = array<i64: 10, 64>}, {pipeline_mode = #tpu.pipeline_mode<synchronous>, transform_indices = @transform_1, window_bounds = array<i64: 64, 64>}, {pipeline_mode = #tpu.pipeline_mode<synchronous>, transform_indices = @transform_2, window_bounds = array<i64: 64, 1>}, {pipeline_mode = #tpu.pipeline_mode<synchronous>, transform_indices = @transform_3, window_bounds = array<i64: 64, 64>}, {pipeline_mode = #tpu.pipeline_mode<synchronous>, transform_indices = @transform_4, window_bounds = array<i64: 64, 1>}, {pipeline_mode = #tpu.pipeline_mode<synchronous>, transform_indices = @transform_5, window_bounds = array<i64: 1, 64>}, {pipeline_mode = #tpu.pipeline_mode<synchronous>, transform_indices = @transform_6, window_bounds = array<i64: 1, 1>}, {transform_indices = @transform_7, window_bounds = array<i64: 1, 1, 10>}]} {
    %c0 = arith.constant 0 : index
    %c0_0 = arith.constant 0 : index
    %0 = vector.load %arg1[%c0, %c0_0] : memref<10x64xf32, #tpu.memory_space<vmem>>, vector<10x64xf32>
    %1 = tpu.transpose %0, [1, 0] : vector<10x64xf32> -> vector<64x10xf32>
    %2 = arith.truncf %1 : vector<64x10xf32> to vector<64x10xbf16>
    %c0_1 = arith.constant 0 : index
    %c0_2 = arith.constant 0 : index
    %3 = vector.load %arg2[%c0_1, %c0_2] : memref<64x64xbf16, #tpu.memory_space<vmem>>, vector<64x64xbf16>
    %cst = arith.constant dense<0.000000e+00> : vector<64x10xf32>
    %4 = tpu.matmul %3, %2, %cst {dimension_numbers = #tpu.dot_dimension_numbers<[1], [0], [0], [1], [0, 0, 1, 1], [], []>} : vector<64x64xbf16>, vector<64x10xbf16>, vector<64x10xf32> -> vector<64x10xf32>
    %c0_3 = arith.constant 0 : index
    %c0_4 = arith.constant 0 : index
    %5 = vector.load %arg3[%c0_3, %c0_4] : memref<64x1xf32, #tpu.memory_space<vmem>>, vector<64x1xf32>
    %6 = vector.broadcast %5 : vector<64x1xf32> to vector<64x10xf32>
    %7 = arith.addf %4, %6 : vector<64x10xf32>
    %8 = math.tanh %7 : vector<64x10xf32>
    %cst_5 = arith.constant 1.000000e+00 : f32
    %9 = vector.broadcast %cst_5 : f32 to vector<64x10xf32>
    %10 = arith.addf %9, %8 : vector<64x10xf32>
    %11 = arith.mulf %7, %10 : vector<64x10xf32>
    %c0_6 = arith.constant 0 : index
    %c0_7 = arith.constant 0 : index
    %12 = vector.load %arg4[%c0_6, %c0_7] : memref<64x64xbf16, #tpu.memory_space<vmem>>, vector<64x64xbf16>
    %13 = arith.truncf %11 : vector<64x10xf32> to vector<64x10xbf16>
    %cst_8 = arith.constant dense<0.000000e+00> : vector<64x10xf32>
    %14 = tpu.matmul %12, %13, %cst_8 {dimension_numbers = #tpu.dot_dimension_numbers<[1], [0], [0], [1], [0, 0, 1, 1], [], []>} : vector<64x64xbf16>, vector<64x10xbf16>, vector<64x10xf32> -> vector<64x10xf32>
    %c0_9 = arith.constant 0 : index
    %c0_10 = arith.constant 0 : index
    %15 = vector.load %arg5[%c0_9, %c0_10] : memref<64x1xf32, #tpu.memory_space<vmem>>, vector<64x1xf32>
    %16 = vector.broadcast %15 : vector<64x1xf32> to vector<64x10xf32>
    %17 = arith.addf %14, %16 : vector<64x10xf32>
    %18 = math.tanh %17 : vector<64x10xf32>
    %cst_11 = arith.constant 1.000000e+00 : f32
    %19 = vector.broadcast %cst_11 : f32 to vector<64x10xf32>
    %20 = arith.addf %19, %18 : vector<64x10xf32>
    %21 = arith.mulf %17, %20 : vector<64x10xf32>
    %c0_12 = arith.constant 0 : index
    %c0_13 = arith.constant 0 : index
    %22 = vector.load %arg6[%c0_12, %c0_13] : memref<1x64xbf16, #tpu.memory_space<vmem>>, vector<1x64xbf16>
    %23 = arith.truncf %21 : vector<64x10xf32> to vector<64x10xbf16>
    %cst_14 = arith.constant dense<0.000000e+00> : vector<1x10xf32>
    %24 = tpu.matmul %22, %23, %cst_14 {dimension_numbers = #tpu.dot_dimension_numbers<[1], [0], [0], [1], [0, 0, 1, 1], [], []>} : vector<1x64xbf16>, vector<64x10xbf16>, vector<1x10xf32> -> vector<1x10xf32>
    %c0_15 = arith.constant 0 : index
    %c0_16 = arith.constant 0 : index
    %25 = vector.load %arg7[%c0_15, %c0_16] : memref<1x1xf32, #tpu.memory_space<vmem>>, vector<1x1xf32>
    %26 = vector.broadcast %25 : vector<1x1xf32> to vector<1x10xf32>
    %27 = arith.addf %24, %26 : vector<1x10xf32>
    %28 = math.tanh %27 : vector<1x10xf32>
    %cst_17 = arith.constant 1.000000e+00 : f32
    %29 = vector.broadcast %cst_17 : f32 to vector<1x10xf32>
    %30 = arith.addf %28, %29 : vector<1x10xf32>
    %cst_18 = arith.constant 5.000000e-01 : f32
    %31 = vector.broadcast %cst_18 : f32 to vector<1x10xf32>
    %32 = arith.mulf %31, %30 : vector<1x10xf32>
    %33 = vector.shape_cast %32 : vector<1x10xf32> to vector<1x1x10xf32>
    %c0_19 = arith.constant 0 : index
    %c0_20 = arith.constant 0 : index
    %c0_21 = arith.constant 0 : index
    %34 = vector.load %arg8[%c0_19, %c0_20, %c0_21] : memref<1x1x10xf32, #tpu.memory_space<vmem>>, vector<1x1x10xf32>
    tpu.vector_store %arg8[%c0_19, %c0_20, %c0_21], %33 {strides = array<i32>} : memref<1x1x10xf32, #tpu.memory_space<vmem>>, vector<1x1x10xf32>,
    return
  }
  func.func @transform_0(%arg0: i32) -> (i32, i32) {
    %c0_i32 = arith.constant 0 : i32
    %c0_i32_0 = arith.constant 0 : i32
    return %arg0, %c0_i32 : i32, i32
  }
  func.func @transform_1(%arg0: i32) -> (i32, i32) {
    %c0_i32 = arith.constant 0 : i32
    %c0_i32_0 = arith.constant 0 : i32
    %c0_i32_1 = arith.constant 0 : i32
    return %c0_i32, %c0_i32_0 : i32, i32
  }
  func.func @transform_2(%arg0: i32) -> (i32, i32) {
    %c0_i32 = arith.constant 0 : i32
    %c0_i32_0 = arith.constant 0 : i32
    %c0_i32_1 = arith.constant 0 : i32
    return %c0_i32, %c0_i32_0 : i32, i32
  }
  func.func @transform_3(%arg0: i32) -> (i32, i32) {
    %c0_i32 = arith.constant 0 : i32
    %c0_i32_0 = arith.constant 0 : i32
    %c0_i32_1 = arith.constant 0 : i32
    return %c0_i32, %c0_i32_0 : i32, i32
  }
  func.func @transform_4(%arg0: i32) -> (i32, i32) {
    %c0_i32 = arith.constant 0 : i32
    %c0_i32_0 = arith.constant 0 : i32
    %c0_i32_1 = arith.constant 0 : i32
    return %c0_i32, %c0_i32_0 : i32, i32
  }
  func.func @transform_5(%arg0: i32) -> (i32, i32) {
    %c0_i32 = arith.constant 0 : i32
    %c0_i32_0 = arith.constant 0 : i32
    %c0_i32_1 = arith.constant 0 : i32
    return %c0_i32, %c0_i32_0 : i32, i32
  }
  func.func @transform_6(%arg0: i32) -> (i32, i32) {
    %c0_i32 = arith.constant 0 : i32
    %c0_i32_0 = arith.constant 0 : i32
    %c0_i32_1 = arith.constant 0 : i32
    return %c0_i32, %c0_i32_0 : i32, i32
  }
  func.func @transform_7(%arg0: i32) -> (i32, i32, i32) {
    %c0_i32 = arith.constant 0 : i32
    %c0_i32_0 = arith.constant 0 : i32
    %c0_i32_1 = arith.constant 0 : i32
    return %arg0, %c0_i32, %c0_i32_0 : i32, i32, i32
  }
}

</mosaic_0001>

<llo_original>
// kernel: tpu_custom_call.1
$region0: #{tpu_custom_call.1}
  #allocation0 [shape = 'u32[]', space=smem, size = 0x4, offset = 0x4, fixed_abs, tag = 'smem constant byte address 0x4 - core index']
  #allocation1 [shape = 'u32[72,128]{1,0:T(1,128)}', space=vmem, size = 0x9000, scoped, tag = 'internal scratch']
  #allocation2 [shape = 'f32[1,1]{1,0:T(1,128)S(1)}', space=vmem, size = 0x200, scoped, tag = 'scoped memory for tpu_custom_call.1']
  %s0 = inlined_call_operand.vmem [shape: f32[10,64], index: 0, kind: input, shape index: {}]
  %s1 = inlined_call_operand.vmem [shape: bf16[64,64], index: 1, kind: input, shape index: {}]
  %s2 = inlined_call_operand.vmem [shape: f32[64,1], index: 2, kind: input, shape index: {}]
  %s3 = inlined_call_operand.vmem [shape: bf16[64,64], index: 3, kind: input, shape index: {}]
  %s4 = inlined_call_operand.vmem [shape: f32[64,1], index: 4, kind: input, shape index: {}]
  %s5 = inlined_call_operand.vmem [shape: bf16[1,64], index: 5, kind: input, shape index: {}]
  %s6 = inlined_call_operand.<no memory space> [shape: f32[1,1], index: 6, kind: input, shape index: {}]
  %s7 = inlined_call_operand.hbm [shape: f32[1,1,10], index: 7, kind: output, shape index: {}]
  %s8 = sld [smem:[#allocation0]]
  $region38: #{tpu_custom_call.1} parent=0
    _
  %s10 = ssub.s32 1, %s8
  %s11 = scalar_select 0, %s10, %s8
  %v12 = vstv %s6
  %13 = vst [vmem:[#allocation2] sm:$0x1] %v12
  $region1: #{tpu_custom_call.1} parent=0
    #allocation3 [shape = 'u8[512]{0}', space=vmem, size = 0x400, scoped, tag = 'output window, operand 0, single buffered']
    #allocation4 [shape = 's32[1]{0}', space=sflag, size = 0x4, scoped, tag = 'scoped memory for tpu_custom_call.1']
    %14 = vsyncpa [#allocation4], 0
    // Predicated region
    $region2: #{tpu_custom_call.1} parent=1 // pred_check
      _
    $region3: #{tpu_custom_call.1} parent=1 // pred_check_branch
      %16 = sbr.rel (0) target = $region5
    $region4: #{tpu_custom_call.1} parent=1 // pred_region
      _
    $region5: #{tpu_custom_call.1} parent=1 // pred_fallthru
      _
    // Predicated region
    $region6: #{tpu_custom_call.1} parent=1 // pred_check
      _
    $region7: #{tpu_custom_call.1} parent=1 // pred_check_branch
      %18 = sbr.rel (0) target = $region9
    $region8: #{tpu_custom_call.1} parent=1 // pred_region
      _
    $region9: #{tpu_custom_call.1} parent=1 // pred_fallthru
      _
    // Predicated region
    $region10: #{tpu_custom_call.1} parent=1 // pred_check
      _
    $region11: #{tpu_custom_call.1} parent=1 // pred_check_branch
      %20 = sbr.rel (0) target = $region13
    $region12: #{tpu_custom_call.1} parent=1 // pred_region
      _
    $region13: #{tpu_custom_call.1} parent=1 // pred_fallthru
      _
    // Predicated region
    $region14: #{tpu_custom_call.1} parent=1 // pred_check
      _
    $region15: #{tpu_custom_call.1} parent=1 // pred_check_branch
      %22 = sbr.rel (0) target = $region17
    $region16: #{tpu_custom_call.1} parent=1 // pred_region
      _
    $region17: #{tpu_custom_call.1} parent=1 // pred_fallthru
      _
    // Predicated region
    $region18: #{tpu_custom_call.1} parent=1 // pred_check
      _
    $region19: #{tpu_custom_call.1} parent=1 // pred_check_branch
      %24 = sbr.rel (0) target = $region21
    $region20: #{tpu_custom_call.1} parent=1 // pred_region
      _
    $region21: #{tpu_custom_call.1} parent=1 // pred_fallthru
      _
    // Predicated region
    $region22: #{tpu_custom_call.1} parent=1 // pred_check
      _
    $region23: #{tpu_custom_call.1} parent=1 // pred_check_branch
      %26 = sbr.rel (0) target = $region25
    $region24: #{tpu_custom_call.1} parent=1 // pred_region
      _
    $region25: #{tpu_custom_call.1} parent=1 // pred_fallthru
      _
    // Predicated region
    $region26: #{tpu_custom_call.1} parent=1 // pred_check
      _
    $region27: #{tpu_custom_call.1} parent=1 // pred_check_branch
      %28 = sbr.rel (0) target = $region29
    $region28: #{tpu_custom_call.1} parent=1 // pred_region
      _
    $region29: #{tpu_custom_call.1} parent=1 // pred_fallthru
      _
    %v30 = vld [vmem:[%s0] sm:$0xff]
    %v31 = vld [vmem:[%s0 + $0x8] sm:$0x3]
    %32 = vxpose.xlu0.b32.start [1/16] %v30, 128
    %33 = vxpose.xlu0.b32.cont [2/16] %v31, 128
    %34 = vxpose.xlu0.b32.cont [3/16] 0.0, 128
    %35 = vxpose.xlu0.b32.cont [4/16] 0.0, 128
    %36 = vxpose.xlu0.b32.cont [5/16] 0.0, 128
    %37 = vxpose.xlu0.b32.cont [6/16] 0.0, 128
    %38 = vxpose.xlu0.b32.cont [7/16] 0.0, 128
    %39 = vxpose.xlu0.b32.cont [8/16] 0.0, 128
    %40 = vxpose.xlu0.b32.cont [9/16] 0.0, 128
    %41 = vxpose.xlu0.b32.cont [10/16] 0.0, 128
    %42 = vxpose.xlu0.b32.cont [11/16] 0.0, 128
    %43 = vxpose.xlu0.b32.cont [12/16] 0.0, 128
    %44 = vxpose.xlu0.b32.cont [13/16] 0.0, 128
    %45 = vxpose.xlu0.b32.cont [14/16] 0.0, 128
    %46 = vxpose.xlu0.b32.cont [15/16] 0.0, 128
    %47 = vxpose.xlu0.b32.end [16/16] 0.0, 128
    %v48 = vpop.trf.xlu0
    %v49 = vpop.trf.xlu0
    %v50 = vpop.trf.xlu0
    %v51 = vpop.trf.xlu0
    %v52 = vpop.trf.xlu0
    %v53 = vpop.trf.xlu0
    %v54 = vpop.trf.xlu0
    %v55 = vpop.trf.xlu0
    %v56 = vpop.trf.xlu0
    %v57 = vpop.trf.xlu0
    %v58 = vpop.trf.xlu0
    %v59 = vpop.trf.xlu0
    %v60 = vpop.trf.xlu0
    %v61 = vpop.trf.xlu0
    %v62 = vpop.trf.xlu0
    %v63 = vpop.trf.xlu0
    %v64 = vpack.c.bf16 %v49, %v48
    %v65 = vpack.c.bf16 %v51, %v50
    %v66 = vpack.c.bf16 %v53, %v52
    %v67 = vpack.c.bf16 %v55, %v54
    %v68 = vld [vmem:[%s1] sm:$0xf]
    %v69 = vld [vmem:[%s1 + $0x4] sm:$0xf]
    %v70 = vld [vmem:[%s1 + $0x8] sm:$0xf]
    %v71 = vld [vmem:[%s1 + $0xc] sm:$0xf]
    %v72 = vld [vmem:[%s1 + $0x10] sm:$0xf]
    %v73 = vld [vmem:[%s1 + $0x14] sm:$0xf]
    %v74 = vld [vmem:[%s1 + $0x18] sm:$0xf]
    %v75 = vld [vmem:[%s1 + $0x1c] sm:$0xf]
    %v76 = vld [vmem:[%s2] sm:$0xff]
    %v77 = vld [vmem:[%s2 + $0x8] sm:$0xff]
    %v78 = vld [vmem:[%s2 + $0x10] sm:$0xff]
    %v79 = vld [vmem:[%s2 + $0x18] sm:$0xff]
    %v80 = vld [vmem:[%s2 + $0x20] sm:$0xff]
    %v81 = vld [vmem:[%s2 + $0x28] sm:$0xff]
    %v82 = vld [vmem:[%s2 + $0x30] sm:$0xff]
    %v83 = vld [vmem:[%s2 + $0x38] sm:$0xff]
    %85 = vset.pattern.permute.xlu0 0
    %86 = vperm.xlu0 %85, %v76
    %v87 = vpop.permute.xlu0 %86
    %90 = vset.pattern.permute.xlu0 0
    %91 = vperm.xlu0 %90, %v77
    %v92 = vpop.permute.xlu0 %91
    %95 = vset.pattern.permute.xlu0 0
    %96 = vperm.xlu0 %95, %v78
    %v97 = vpop.permute.xlu0 %96
    %100 = vset.pattern.permute.xlu0 0
    %101 = vperm.xlu0 %100, %v79
    %v102 = vpop.permute.xlu0 %101
    %105 = vset.pattern.permute.xlu0 0
    %106 = vperm.xlu0 %105, %v80
    %v107 = vpop.permute.xlu0 %106
    %110 = vset.pattern.permute.xlu0 0
    %111 = vperm.xlu0 %110, %v81
    %v112 = vpop.permute.xlu0 %111
    %115 = vset.pattern.permute.xlu0 0
    %116 = vperm.xlu0 %115, %v82
    %v117 = vpop.permute.xlu0 %116
    %120 = vset.pattern.permute.xlu0 0
    %121 = vperm.xlu0 %120, %v83
    %v122 = vpop.permute.xlu0 %121
    %v132 = vunpack.c.l.b16 %v68
    %v133 = vunpack.c.l.b16 %v69
    %v134 = vunpack.c.l.b16 %v70
    %v135 = vunpack.c.l.b16 %v71
    %v136 = vunpack.c.l.b16 %v72
    %v137 = vunpack.c.l.b16 %v73
    %v138 = vunpack.c.l.b16 %v74
    %v139 = vunpack.c.l.b16 %v75
    %v140 = vpack.c.b16 %v133, %v132
    %v141 = vpack.c.b16 %v135, %v134
    %v142 = vpack.c.b16 %v137, %v136
    %v143 = vpack.c.b16 %v139, %v138
    %vm144 = vcmask 523264
    %v146 = vsel %vm144, %v140, 0
    %v149 = vsel %vm144, %v141, 0
    %v152 = vsel %vm144, %v142, 0
    %v155 = vsel %vm144, %v143, 0
    %157 = vmatpush.bf16.msra.mxu0 0
    %158 = vmatpush.bf16.msra.mxu0 0
    %159 = vmatpush.bf16.msra.mxu0 0
    %160 = vmatpush.bf16.msra.mxu0 0
    %161 = vmatpush.bf16.msra.mxu0 %v67
    %162 = vmatpush.bf16.msra.mxu0 %v66
    %163 = vmatpush.bf16.msra.mxu0 %v65
    %164 = vmatpush.bf16.msra.mxu0 %v64
    %165 = vmatmul.bf16.gmra.mxu0 %v146
    %v166 = vpop.f32.mrf.mxu0
    %v167 = vadd.f32 %v87, %v166
    %v168 = vpop.f32.mrf.mxu0
    %v169 = vadd.f32 %v92, %v168
    %170 = vmatmul.bf16.gmra.mxu0 %v149
    %v171 = vpop.f32.mrf.mxu0
    %v172 = vadd.f32 %v97, %v171
    %v173 = vpop.f32.mrf.mxu0
    %v174 = vadd.f32 %v102, %v173
    %175 = vmatmul.bf16.gmra.mxu0 %v152
    %v176 = vpop.f32.mrf.mxu0
    %v177 = vadd.f32 %v107, %v176
    %v178 = vpop.f32.mrf.mxu0
    %v179 = vadd.f32 %v112, %v178
    %180 = vmatmul.bf16.gmra.mxu0 %v155
    %v181 = vpop.f32.mrf.mxu0
    %v182 = vadd.f32 %v117, %v181
    %v183 = vpop.f32.mrf.mxu0
    %v184 = vadd.f32 %v122, %v183
    %185 = vdwg.mxu0
    %v186 = vtanh.pop %v167
    %v187 = vtanh.pop %v169
    %v188 = vtanh.pop %v172
    %v189 = vtanh.pop %v174
    %v190 = vtanh.pop %v177
    %v191 = vtanh.pop %v179
    %v192 = vtanh.pop %v182
    %v193 = vtanh.pop %v184
    %v194 = vadd.f32 %v186, 1.0
    %v195 = vadd.f32 %v187, 1.0
    %v196 = vadd.f32 %v188, 1.0
    %v197 = vadd.f32 %v189, 1.0
    %v198 = vadd.f32 %v190, 1.0
    %v199 = vadd.f32 %v191, 1.0
    %v200 = vadd.f32 %v192, 1.0
    %v201 = vadd.f32 %v193, 1.0
    %v202 = vmul.f32 %v167, %v194
    %v203 = vmul.f32 %v169, %v195
    %v204 = vmul.f32 %v172, %v196
    %v205 = vmul.f32 %v174, %v197
    %v206 = vmul.f32 %v177, %v198
    %v207 = vmul.f32 %v179, %v199
    %v208 = vmul.f32 %v182, %v200
    %v209 = vmul.f32 %v184, %v201
    %v210 = vld [vmem:[%s3] sm:$0xf]
    %v211 = vld [vmem:[%s3 + $0x4] sm:$0xf]
    %v212 = vld [vmem:[%s3 + $0x8] sm:$0xf]
    %v213 = vld [vmem:[%s3 + $0xc] sm:$0xf]
    %v214 = vld [vmem:[%s3 + $0x10] sm:$0xf]
    %v215 = vld [vmem:[%s3 + $0x14] sm:$0xf]
    %v216 = vld [vmem:[%s3 + $0x18] sm:$0xf]
    %v217 = vld [vmem:[%s3 + $0x1c] sm:$0xf]
    %v218 = vpack.c.bf16 %v203, %v202
    %v219 = vpack.c.bf16 %v205, %v204
    %v220 = vpack.c.bf16 %v207, %v206
    %v221 = vpack.c.bf16 %v209, %v208
    %v222 = vld [vmem:[%s4] sm:$0xff]
    %v223 = vld [vmem:[%s4 + $0x8] sm:$0xff]
    %v224 = vld [vmem:[%s4 + $0x10] sm:$0xff]
    %v225 = vld [vmem:[%s4 + $0x18] sm:$0xff]
    %v226 = vld [vmem:[%s4 + $0x20] sm:$0xff]
    %v227 = vld [vmem:[%s4 + $0x28] sm:$0xff]
    %v228 = vld [vmem:[%s4 + $0x30] sm:$0xff]
    %v229 = vld [vmem:[%s4 + $0x38] sm:$0xff]
    %231 = vset.pattern.permute.xlu0 0
    %232 = vperm.xlu0 %231, %v222
    %v233 = vpop.permute.xlu0 %232
    %236 = vset.pattern.permute.xlu0 0
    %237 = vperm.xlu0 %236, %v223
    %v238 = vpop.permute.xlu0 %237
    %241 = vset.pattern.permute.xlu0 0
    %242 = vperm.xlu0 %241, %v224
    %v243 = vpop.permute.xlu0 %242
    %246 = vset.pattern.permute.xlu0 0
    %247 = vperm.xlu0 %246, %v225
    %v248 = vpop.permute.xlu0 %247
    %251 = vset.pattern.permute.xlu0 0
    %252 = vperm.xlu0 %251, %v226
    %v253 = vpop.permute.xlu0 %252
    %256 = vset.pattern.permute.xlu0 0
    %257 = vperm.xlu0 %256, %v227
    %v258 = vpop.permute.xlu0 %257
    %261 = vset.pattern.permute.xlu0 0
    %262 = vperm.xlu0 %261, %v228
    %v263 = vpop.permute.xlu0 %262
    %266 = vset.pattern.permute.xlu0 0
    %267 = vperm.xlu0 %266, %v229
    %v268 = vpop.permute.xlu0 %267
    %v278 = vunpack.c.l.b16 %v210
    %v279 = vunpack.c.l.b16 %v211
    %v280 = vunpack.c.l.b16 %v212
    %v281 = vunpack.c.l.b16 %v213
    %v282 = vunpack.c.l.b16 %v214
    %v283 = vunpack.c.l.b16 %v215
    %v284 = vunpack.c.l.b16 %v216
    %v285 = vunpack.c.l.b16 %v217
    %v286 = vpack.c.b16 %v279, %v278
    %v287 = vpack.c.b16 %v281, %v280
    %v288 = vpack.c.b16 %v283, %v282
    %v289 = vpack.c.b16 %v285, %v284
    %v291 = vsel %vm144, %v286, 0
    %v294 = vsel %vm144, %v287, 0
    %v297 = vsel %vm144, %v288, 0
    %v300 = vsel %vm144, %v289, 0
    %302 = vmatpush.bf16.msra.mxu0 0
    %303 = vmatpush.bf16.msra.mxu0 0
    %304 = vmatpush.bf16.msra.mxu0 0
    %305 = vmatpush.bf16.msra.mxu0 0
    %306 = vmatpush.bf16.msra.mxu0 %v221
    %307 = vmatpush.bf16.msra.mxu0 %v220
    %308 = vmatpush.bf16.msra.mxu0 %v219
    %309 = vmatpush.bf16.msra.mxu0 %v218
    %310 = vmatmul.bf16.gmra.mxu0 %v291
    %v311 = vpop.f32.mrf.mxu0
    %v312 = vadd.f32 %v233, %v311
    %v313 = vpop.f32.mrf.mxu0
    %v314 = vadd.f32 %v238, %v313
    %315 = vmatmul.bf16.gmra.mxu0 %v294
    %v316 = vpop.f32.mrf.mxu0
    %v317 = vadd.f32 %v243, %v316
    %v318 = vpop.f32.mrf.mxu0
    %v319 = vadd.f32 %v248, %v318
    %320 = vmatmul.bf16.gmra.mxu0 %v297
    %v321 = vpop.f32.mrf.mxu0
    %v322 = vadd.f32 %v253, %v321
    %v323 = vpop.f32.mrf.mxu0
    %v324 = vadd.f32 %v258, %v323
    %325 = vmatmul.bf16.gmra.mxu0 %v300
    %v326 = vpop.f32.mrf.mxu0
    %v327 = vadd.f32 %v263, %v326
    %v328 = vpop.f32.mrf.mxu0
    %v329 = vadd.f32 %v268, %v328
    %330 = vdwg.mxu0
    %v331 = vtanh.pop %v312
    %v332 = vtanh.pop %v314
    %v333 = vtanh.pop %v317
    %v334 = vtanh.pop %v319
    %v335 = vtanh.pop %v322
    %v336 = vtanh.pop %v324
    %v337 = vtanh.pop %v327
    %v338 = vtanh.pop %v329
    %v339 = vadd.f32 %v331, 1.0
    %v340 = vadd.f32 %v332, 1.0
    %v341 = vadd.f32 %v333, 1.0
    %v342 = vadd.f32 %v334, 1.0
    %v343 = vadd.f32 %v335, 1.0
    %v344 = vadd.f32 %v336, 1.0
    %v345 = vadd.f32 %v337, 1.0
    %v346 = vadd.f32 %v338, 1.0
    %v347 = vmul.f32 %v312, %v339
    %v348 = vmul.f32 %v314, %v340
    %v349 = vmul.f32 %v317, %v341
    %v350 = vmul.f32 %v319, %v342
    %v351 = vmul.f32 %v322, %v343
    %v352 = vmul.f32 %v324, %v344
    %v353 = vmul.f32 %v327, %v345
    %v354 = vmul.f32 %v329, %v346
    %v355 = vld [vmem:[%s5] sm:$0x1]
    %v356 = vpack.c.bf16 %v348, %v347
    %v357 = vpack.c.bf16 %v350, %v349
    %v358 = vpack.c.bf16 %v352, %v351
    %v359 = vpack.c.bf16 %v354, %v353
    %v360 = vld [vmem:[#allocation2] sm:$0x1]
    %362 = vset.pattern.permute.xlu0 0
    %363 = vperm.xlu0 %362, %v360
    %v364 = vpop.permute.xlu0 %363
    %v366 = vperm.slane %v364, 0
    %v368 = vsel %vm144, %v355, 0
    %370 = vmatpush.bf16.msra.mxu0 0
    %371 = vmatpush.bf16.msra.mxu0 0
    %372 = vmatpush.bf16.msra.mxu0 0
    %373 = vmatpush.bf16.msra.mxu0 0
    %374 = vmatpush.bf16.msra.mxu0 %v359
    %375 = vmatpush.bf16.msra.mxu0 %v358
    %376 = vmatpush.bf16.msra.mxu0 %v357
    %377 = vmatpush.bf16.msra.mxu0 %v356
    %378 = vmatmul.bf16.gmra.mxu0 %v368
    %v379 = vpop.f32.mrf.mxu0
    %v380 = vadd.f32 %v366, %v379
    %v381 = vpop.f32.mrf.mxu0
    %382 = vdwg.mxu0
    %v383 = vtanh.pop %v380
    %v384 = vadd.f32 %v383, 1.0
    %v385 = vmul.f32 %v384, 0.5
    %vm386 = vcmask 73728
    %387 = vst.msk [vmem:[#allocation3] sm:$0x1] %vm386, %v385
    // Predicated region
    $region30: #{tpu_custom_call.1} parent=1 // pred_check
      _
    $region31: #{tpu_custom_call.1} parent=1 // pred_check_branch
      %389 = sbr.rel (0) target = $region33
    $region32: #{tpu_custom_call.1} parent=1 // pred_region
      %391 = vsyncadd [#allocation4], 0
      %s393 = sshll.u32 [#allocation3], 4
      %s394 = int_to_ptr.vmem [resolvable:$true] %s393
      %s395 = sshll.u32 %s7, 4
      %s396 = int_to_ptr.hbm [resolvable:$true] %s395
      %398 = dma.vmem_to_hbm [thread:$0]  %s394, 16, %s396, [#allocation4]
    $region33: #{tpu_custom_call.1} parent=1 // pred_fallthru
      _
    // Predicated region
    $region34: #{tpu_custom_call.1} parent=1 // pred_check
      _
    $region35: #{tpu_custom_call.1} parent=1 // pred_check_branch
      %400 = sbr.rel (0) target = $region37
    $region36: #{tpu_custom_call.1} parent=1 // pred_region
      %402 = dma.done [#allocation4], 16
    $region37: #{tpu_custom_call.1} parent=1 // pred_fallthru
      _
    %403 = vsyncpa [#allocation4], 1

</llo_original>
